<compile_context>
chip_gen: v7x
topology: tpu7x:2x2x1
jax: 0.10.0
libtpu: 0.0.40
codegen_flags: <defaults>
</compile_context>

<pallas_src>
import functools

import jax
import jax.numpy as jnp
from jax.experimental import pallas as pl
from jax.experimental.pallas import tpu as pltpu

LANES = 128
MAX_ROW_TILE = 4096   # (4096, 128) f32 block = 2 MiB per input per grid step
MAX_CORES = 2         # leading "parallel" grid axis (megacore split on v7x)


def _bce_logits_elementwise(x, t, smooth_factor, ignore_index):
    """Numerically stable BCE-with-logits on f32 tiles (reduction='none')."""
    # Label smoothing folded into a single FMA:
    #   (1 - t)*sf + t*(1 - sf) == sf + t*(1 - 2*sf)
    if smooth_factor is not None:
        st = smooth_factor + t * (1.0 - 2.0 * smooth_factor)
    else:
        st = t
    # loss = max(x, 0) - x*st + log1p(exp(-|x|))
    # TODO(synk): weight / pos_weight buffers are None in this config; per-channel
    #             weighting is not implemented in the flattened layout.
    loss = jnp.maximum(x, 0.0) - x * st + jnp.log1p(jnp.exp(-jnp.abs(x)))
    # ignore_index mask uses the UN-smoothed target, like the PyTorch module.
    if ignore_index is not None:
        loss = jnp.where(t == float(ignore_index), 0.0, loss)
    return loss


def _soft_bce_reduce_kernel(pred_ref, true_ref, out_ref, *,
                            smooth_factor, ignore_index, n_elems,
                            row_tile, acc_rows, blocks_per_core,
                            apply_tail_mask):
    """One (row_tile, 128) tile per grid step; out_ref is a resident
    (1, acc_rows, 128) f32 accumulator block for the current core."""
    p = pl.program_id(0)
    i = pl.program_id(1)

    @pl.when(i == 0)
    def _():
        out_ref[...] = jnp.zeros_like(out_ref)

    x = pred_ref[...].astype(jnp.float32)
    t = true_ref[...].astype(jnp.float32)
    loss = _bce_logits_elementwise(x, t, smooth_factor, ignore_index)

    # Tail mask: zero anything past the logical element count.  Covers the
    # <128-element reshape pad, the partial last block, and fully out-of-range
    # (clamped) blocks from the multi-core split.  Static no-op when not needed.
    if apply_tail_mask:
        block_idx = p * blocks_per_core + i
        row_ids = jax.lax.broadcasted_iota(jnp.int32, (row_tile, LANES), 0)
        lane_ids = jax.lax.broadcasted_iota(jnp.int32, (row_tile, LANES), 1)
        # int32 flat index: fine for < 2^31 elements.
        flat = (block_idx * row_tile + row_ids) * LANES + lane_ids
        loss = jnp.where(flat < n_elems, loss, 0.0)

    # (row_tile, 128) -> (acc_rows, 128) with vreg-wise VPU adds only; the
    # cross-lane/sublane reduce to a scalar is deferred to the wrapper.
    partial = loss.reshape(row_tile // acc_rows, acc_rows, LANES).sum(axis=0)
    out_ref[...] += partial[None]


def _soft_bce_none_kernel(pred_ref, true_ref, out_ref, *,
                          smooth_factor, ignore_index):
    """Elementwise loss tile; lane-dense (row_tile, 128) output block."""
    x = pred_ref[...].astype(jnp.float32)
    t = true_ref[...].astype(jnp.float32)
    loss = _bce_logits_elementwise(x, t, smooth_factor, ignore_index)
    out_ref[...] = loss.astype(out_ref.dtype)


def _flatten_to_lanes(y_pred, y_true):
    """Flatten both inputs into (rows, 128) lane-dense slabs (+ pad count)."""
    n = y_pred.size
    rows = pl.cdiv(n, LANES)
    pad = rows * LANES - n

    pred_flat = jnp.ravel(y_pred)
    true_flat = jnp.ravel(y_true)
    if pad:  # only when numel % 128 != 0; handled inside / sliced off outside
        pred_flat = jnp.pad(pred_flat, (0, pad))
        true_flat = jnp.pad(true_flat, (0, pad))

    return pred_flat.reshape(rows, LANES), true_flat.reshape(rows, LANES), n, rows


def soft_bce_with_logits_loss(
    y_pred,
    y_true,
    *,
    smooth_factor=0.1,
    ignore_index=-100,
    reduction="mean",
):
    """y_pred: (N, C, H, W); y_true: (N, C, H, W), (N, 1, H, W) or (N, H, W)."""
    if y_true.ndim == y_pred.ndim - 1:
        y_true = y_true[:, None]
    if y_true.shape != y_pred.shape:
        # TODO(synk): (N,1,H,W) targets are materialized here; a BlockSpec-level
        #             broadcast would avoid this extra HBM pass.
        y_true = jnp.broadcast_to(y_true, y_pred.shape)

    pred2d, true2d, n, rows = _flatten_to_lanes(y_pred, y_true)

    row_tile = MAX_ROW_TILE if rows >= MAX_ROW_TILE else rows
    total_blocks = pl.cdiv(rows, row_tile)

    bytes_in = (pred2d.size * pred2d.dtype.itemsize
                + true2d.size * true2d.dtype.itemsize)

    if reduction == "none":
        out2d = pl.pallas_call(
            functools.partial(
                _soft_bce_none_kernel,
                smooth_factor=smooth_factor,
                ignore_index=ignore_index,
            ),
            out_shape=jax.ShapeDtypeStruct((rows, LANES), y_pred.dtype),
            grid_spec=pltpu.PrefetchScalarGridSpec(
                num_scalar_prefetch=0,
                grid=(total_blocks,),
                in_specs=[
                    pl.BlockSpec((row_tile, LANES), lambda i: (i, 0)),
                    pl.BlockSpec((row_tile, LANES), lambda i: (i, 0)),
                ],
                out_specs=pl.BlockSpec((row_tile, LANES), lambda i: (i, 0)),
            ),
            compiler_params=pltpu.CompilerParams(
                dimension_semantics=("parallel",),
                vmem_limit_bytes=32 << 20,
            ),
            cost_estimate=pl.CostEstimate(
                flops=8 * n,
                transcendentals=2 * n,
                bytes_accessed=bytes_in + rows * LANES * y_pred.dtype.itemsize,
            ),
        )(pred2d, true2d)
        return out2d.reshape(-1)[:n].reshape(y_pred.shape)

    if reduction not in ("mean", "sum"):
        raise NotImplementedError(f"unsupported reduction: {reduction!r}")

    acc_rows = 8 if row_tile % 8 == 0 else 1
    # Only spread across cores when there is more than one block of work;
    # avoids redundant clamped blocks (and the tail mask) on small inputs.
    ncores = min(MAX_CORES, total_blocks)
    blocks_per_core = pl.cdiv(total_blocks, ncores)
    covered = ncores * blocks_per_core * row_tile * LANES
    apply_tail_mask = covered != n

    kernel = functools.partial(
        _soft_bce_reduce_kernel,
        smooth_factor=smooth_factor,
        ignore_index=ignore_index,
        n_elems=n,
        row_tile=row_tile,
        acc_rows=acc_rows,
        blocks_per_core=blocks_per_core,
        apply_tail_mask=apply_tail_mask,
    )

    def in_map(p, i):
        # Clamp so a grid point past the last block re-reads a valid block;
        # its contribution is zeroed by the in-kernel tail mask.
        return (jnp.minimum(p * blocks_per_core + i, total_blocks - 1), 0)

    partials = pl.pallas_call(
        kernel,
        out_shape=jax.ShapeDtypeStruct((ncores, acc_rows, LANES), jnp.float32),
        grid_spec=pltpu.PrefetchScalarGridSpec(
            num_scalar_prefetch=0,
            grid=(ncores, blocks_per_core),
            in_specs=[
                pl.BlockSpec((row_tile, LANES), in_map),
                pl.BlockSpec((row_tile, LANES), in_map),
            ],
            out_specs=pl.BlockSpec((1, acc_rows, LANES), lambda p, i: (p, 0, 0)),
        ),
        compiler_params=pltpu.CompilerParams(
            dimension_semantics=("parallel", "arbitrary"),
            vmem_limit_bytes=32 << 20,
        ),
        cost_estimate=pl.CostEstimate(
            flops=8 * n,
            transcendentals=2 * n,
            bytes_accessed=bytes_in + ncores * acc_rows * LANES * 4,
        ),
    )(pred2d, true2d)

    total = jnp.sum(partials, dtype=jnp.float32)
    if reduction == "mean":
        # Matches pytorch-toolbelt: mean over ALL elements, including ignored ones.
        return total / jnp.float32(n)
    return total


def _reference_elementwise(y_pred, y_true, smooth_factor=0.1, ignore_index=-100):
    y_true = jnp.broadcast_to(y_true, y_pred.shape).astype(jnp.float32)
    x = y_pred.astype(jnp.float32)
    st = (1 - y_true) * smooth_factor + y_true * (1 - smooth_factor)
    loss = jnp.maximum(x, 0.0) - x * st + jnp.log1p(jnp.exp(-jnp.abs(x)))
    mask = (y_true != ignore_index).astype(jnp.float32)
    return loss * mask


if __name__ == "__main__":
    key = jax.random.PRNGKey(0)
    k1, k2 = jax.random.split(key)
    N, C, H, W = 2, 4, 16, 16
    y_pred = jax.random.normal(k1, (N, C, H, W), dtype=jnp.float32)
    # binary targets in {0, 1}
    y_true = jax.random.bernoulli(k2, 0.5, (N, C, H, W)).astype(jnp.float32)

    ref_elem = _reference_elementwise(y_pred, y_true)

    out_mean = jax.block_until_ready(
        soft_bce_with_logits_loss(
            y_pred, y_true, smooth_factor=0.1, ignore_index=-100, reduction="mean"
        )
    )
    assert jnp.allclose(out_mean, jnp.mean(ref_elem), rtol=1e-5, atol=1e-6), (
        out_mean, jnp.mean(ref_elem))

    out_sum = jax.block_until_ready(
        soft_bce_with_logits_loss(
            y_pred, y_true, smooth_factor=0.1, ignore_index=-100, reduction="sum"
        )
    )
    assert jnp.allclose(out_sum, jnp.sum(ref_elem), rtol=1e-5, atol=1e-4), (
        out_sum, jnp.sum(ref_elem))

    out_none = jax.block_until_ready(
        soft_bce_with_logits_loss(
            y_pred, y_true, smooth_factor=0.1, ignore_index=-100, reduction="none"
        )
    )
    assert out_none.shape == y_pred.shape
    assert jnp.allclose(out_none, ref_elem, rtol=1e-5, atol=1e-6)

    print("KERNEL_OK")
</pallas_src>

<mosaic_0001>
module attributes {stable_mosaic.version = 11 : i64} {
  func.func @_soft_bce_reduce_kernel(%arg0: i32, %arg1: i32, %arg2: memref<16x128xf32, #tpu.memory_space<vmem>>, %arg3: memref<16x128xf32, #tpu.memory_space<vmem>>, %arg4: memref<1x8x128xf32, #tpu.memory_space<vmem>>) attributes {dimension_semantics = [#tpu.dimension_semantics<parallel>, #tpu.dimension_semantics<arbitrary>], iteration_bounds = array<i64: 1, 1>, scalar_prefetch = 0 : i64, scratch_operands = 0 : i64, tpu.core_type = #tpu.core_type<tc>, window_params = [{transform_indices = @transform_0, window_bounds = array<i64: 16, 128>}, {transform_indices = @transform_1, window_bounds = array<i64: 16, 128>}, {transform_indices = @transform_2, window_bounds = array<i64: 1, 8, 128>}]} {
    %c0_i32 = arith.constant 0 : i32
    %0 = arith.cmpi eq, %arg1, %c0_i32 : i32
    %1 = arith.extui %0 : i1 to i32
    %c0_i32_0 = arith.constant 0 : i32
    %2 = arith.cmpi ne, %1, %c0_i32_0 : i32
    scf.if %2 {
      %cst_16 = arith.constant 0.000000e+00 : f32
      %29 = vector.broadcast %cst_16 : f32 to vector<1x8x128xf32>
      %c0_17 = arith.constant 0 : index
      %c0_18 = arith.constant 0 : index
      %c0_19 = arith.constant 0 : index
      %30 = vector.load %arg4[%c0_17, %c0_18, %c0_19] : memref<1x8x128xf32, #tpu.memory_space<vmem>>, vector<1x8x128xf32>
      tpu.vector_store %arg4[%c0_17, %c0_18, %c0_19], %29 {strides = array<i32>} : memref<1x8x128xf32, #tpu.memory_space<vmem>>, vector<1x8x128xf32>,
    } else {
    }
    %c0 = arith.constant 0 : index
    %c0_1 = arith.constant 0 : index
    %3 = vector.load %arg2[%c0, %c0_1] : memref<16x128xf32, #tpu.memory_space<vmem>>, vector<16x128xf32>
    %c0_2 = arith.constant 0 : index
    %c0_3 = arith.constant 0 : index
    %4 = vector.load %arg3[%c0_2, %c0_3] : memref<16x128xf32, #tpu.memory_space<vmem>>, vector<16x128xf32>
    %cst = arith.constant 8.000000e-01 : f32
    %5 = vector.broadcast %cst : f32 to vector<16x128xf32>
    %6 = arith.mulf %4, %5 : vector<16x128xf32>
    %cst_4 = arith.constant 1.000000e-01 : f32
    %7 = vector.broadcast %cst_4 : f32 to vector<16x128xf32>
    %8 = arith.addf %7, %6 : vector<16x128xf32>
    %cst_5 = arith.constant 0.000000e+00 : f32
    %9 = vector.broadcast %cst_5 : f32 to vector<16x128xf32>
    %10 = arith.maximumf %3, %9 : vector<16x128xf32>
    %11 = arith.mulf %3, %8 : vector<16x128xf32>
    %12 = arith.subf %10, %11 : vector<16x128xf32>
    %13 = math.absf %3 : vector<16x128xf32>
    %cst_6 = arith.constant 0.000000e+00 : f32
    %14 = vector.broadcast %cst_6 : f32 to vector<16x128xf32>
    %15 = arith.subf %14, %13 : vector<16x128xf32>
    %16 = math.exp %15 : vector<16x128xf32>
    %17 = math.log1p %16 : vector<16x128xf32>
    %18 = arith.addf %12, %17 : vector<16x128xf32>
    %cst_7 = arith.constant -1.000000e+02 : f32
    %19 = vector.broadcast %cst_7 : f32 to vector<16x128xf32>
    %20 = arith.cmpf oeq, %4, %19 : vector<16x128xf32>
    %cst_8 = arith.constant 0.000000e+00 : f32
    %21 = vector.broadcast %cst_8 : f32 to vector<16x128xf32>
    %22 = arith.select %20, %21, %18 : vector<16x128xi1>, vector<16x128xf32>
    %23 = vector.shape_cast %22 : vector<16x128xf32> to vector<2x8x128xf32>
    %cst_9 = arith.constant dense<0.000000e+00> : vector<8x128xf32>
    %24 = vector.multi_reduction <add>, %23, %cst_9 [0] : vector<2x8x128xf32> to vector<8x128xf32>
    %c0_10 = arith.constant 0 : index
    %c0_11 = arith.constant 0 : index
    %c0_12 = arith.constant 0 : index
    %25 = vector.load %arg4[%c0_10, %c0_11, %c0_12] : memref<1x8x128xf32, #tpu.memory_space<vmem>>, vector<1x8x128xf32>
    %26 = vector.shape_cast %24 : vector<8x128xf32> to vector<1x8x128xf32>
    %27 = arith.addf %25, %26 : vector<1x8x128xf32>
    %c0_13 = arith.constant 0 : index
    %c0_14 = arith.constant 0 : index
    %c0_15 = arith.constant 0 : index
    %28 = vector.load %arg4[%c0_13, %c0_14, %c0_15] : memref<1x8x128xf32, #tpu.memory_space<vmem>>, vector<1x8x128xf32>
    tpu.vector_store %arg4[%c0_13, %c0_14, %c0_15], %27 {strides = array<i32>} : memref<1x8x128xf32, #tpu.memory_space<vmem>>, vector<1x8x128xf32>,
    return
  }
  func.func @transform_0(%arg0: i32, %arg1: i32) -> (i32, i32) {
    %c1_i32 = arith.constant 1 : i32
    %0 = arith.muli %arg0, %c1_i32 : i32
    %1 = arith.addi %0, %arg1 : i32
    %c0_i32 = arith.constant 0 : i32
    %2 = arith.minsi %1, %c0_i32 : i32
    %c0_i32_0 = arith.constant 0 : i32
    %c0_i32_1 = arith.constant 0 : i32
    return %2, %c0_i32_0 : i32, i32
  }
  func.func @transform_1(%arg0: i32, %arg1: i32) -> (i32, i32) {
    %c1_i32 = arith.constant 1 : i32
    %0 = arith.muli %arg0, %c1_i32 : i32
    %1 = arith.addi %0, %arg1 : i32
    %c0_i32 = arith.constant 0 : i32
    %2 = arith.minsi %1, %c0_i32 : i32
    %c0_i32_0 = arith.constant 0 : i32
    %c0_i32_1 = arith.constant 0 : i32
    return %2, %c0_i32_0 : i32, i32
  }
  func.func @transform_2(%arg0: i32, %arg1: i32) -> (i32, i32, i32) {
    %c0_i32 = arith.constant 0 : i32
    %c0_i32_0 = arith.constant 0 : i32
    %c0_i32_1 = arith.constant 0 : i32
    return %arg0, %c0_i32, %c0_i32_0 : i32, i32, i32
  }
}

</mosaic_0001>

<llo_original>
// kernel: tpu_custom_call.1
$region0: #{tpu_custom_call.1}
  #allocation0 [shape = 'u32[]', space=smem, size = 0x4, offset = 0x4, fixed_abs, tag = 'smem constant byte address 0x4 - core index']
  #allocation1 [shape = 'u32[144,128]{1,0:T(1,128)}', space=vmem, size = 0x12000, scoped, tag = 'internal scratch']
  %s0 = inlined_call_operand.hbm [shape: f32[16,128], index: 0, kind: input, shape index: {}]
  %s1 = inlined_call_operand.hbm [shape: f32[16,128], index: 1, kind: input, shape index: {}]
  %s2 = inlined_call_operand.hbm [shape: f32[1,8,128], index: 2, kind: output, shape index: {}]
  %s3 = sld [smem:[#allocation0]]
  $region30: #{tpu_custom_call.1} parent=0
    _
  %s5 = ssub.s32 1, %s3
  %s6 = scalar_select 0, %s5, %s3
  $region1: #{tpu_custom_call.1} parent=0
    #allocation2 [shape = 'u8[8192]{0}', space=vmem, size = 0x2000, scoped, tag = 'input window, operand 0, single buffered']
    #allocation3 [shape = 's32[1]{0}', space=sflag, size = 0x4, scoped, tag = 'scoped memory for tpu_custom_call.1']
    #allocation4 [shape = 's32[1]{0}', space=sflag, size = 0x4, scoped, tag = 'scoped memory for tpu_custom_call.1']
    #allocation5 [shape = 'u8[8192]{0}', space=vmem, size = 0x2000, scoped, tag = 'input window, operand 1, single buffered']
    #allocation6 [shape = 's32[1]{0}', space=sflag, size = 0x4, scoped, tag = 'scoped memory for tpu_custom_call.1']
    #allocation7 [shape = 'u8[4096]{0}', space=vmem, size = 0x1000, scoped, tag = 'output window, operand 0, single buffered']
    %7 = vsyncpa [#allocation3], 0
    %8 = vsyncpa [#allocation6], 0
    %9 = vsyncpa [#allocation4], 0
    // Predicated region
    $region2: #{tpu_custom_call.1} parent=1 // pred_check
      _
    $region3: #{tpu_custom_call.1} parent=1 // pred_check_branch
      %11 = sbr.rel (0) target = $region5
    $region4: #{tpu_custom_call.1} parent=1 // pred_region
      %s12 = sadd.s32 0, 0
      %p13 = scmp.lt.s32.totalorder %s12, 0
      %s14 = scalar_select %p13, %s12, 0
      %s15 = smul.u32 2, %s14
      %s17 = ssub.s32 256, 256
      %18 = vsyncadd [#allocation3], %s17
      %s19 = smul.addr %s15, 128
      %s20 = scalar_lea.hbm %s0, %s19
      %s21 = sshll.u32 [#allocation2], 4
      %s22 = int_to_ptr.vmem [resolvable:$true] %s21
      %27 = dma.hbm_to_vmem [thread:$0]  %s20, 256, %s22, [#allocation3], 128, 128, 8
    $region5: #{tpu_custom_call.1} parent=1 // pred_fallthru
      _
    // Predicated region
    $region6: #{tpu_custom_call.1} parent=1 // pred_check
      _
    $region7: #{tpu_custom_call.1} parent=1 // pred_check_branch
      %29 = sbr.rel (0) target = $region9
    $region8: #{tpu_custom_call.1} parent=1 // pred_region
      %s30 = sadd.s32 0, 0
      %p31 = scmp.lt.s32.totalorder %s30, 0
      %s32 = scalar_select %p31, %s30, 0
      %s33 = smul.u32 2, %s32
      %s35 = ssub.s32 256, 256
      %36 = vsyncadd [#allocation6], %s35
      %s37 = smul.addr %s33, 128
      %s38 = scalar_lea.hbm %s1, %s37
      %s39 = sshll.u32 [#allocation5], 4
      %s40 = int_to_ptr.vmem [resolvable:$true] %s39
      %45 = dma.hbm_to_vmem [thread:$0]  %s38, 256, %s40, [#allocation6], 128, 128, 8
    $region9: #{tpu_custom_call.1} parent=1 // pred_fallthru
      _
    // Predicated region
    $region10: #{tpu_custom_call.1} parent=1 // pred_check
      _
    $region11: #{tpu_custom_call.1} parent=1 // pred_check_branch
      %47 = sbr.rel (0) target = $region13
    $region12: #{tpu_custom_call.1} parent=1 // pred_region
      %48 = dma.done [#allocation3], 256
    $region13: #{tpu_custom_call.1} parent=1 // pred_fallthru
      _
    // Predicated region
    $region14: #{tpu_custom_call.1} parent=1 // pred_check
      _
    $region15: #{tpu_custom_call.1} parent=1 // pred_check_branch
      %50 = sbr.rel (0) target = $region17
    $region16: #{tpu_custom_call.1} parent=1 // pred_region
      %51 = dma.done [#allocation6], 256
    $region17: #{tpu_custom_call.1} parent=1 // pred_fallthru
      _
    %s52 = sadd.s32 0, 0
    %p53 = scmp.lt.s32.totalorder %s52, 0
    %s54 = scalar_select %p53, %s52, 0
    %s55 = smul.u32 2, %s54
    %s56 = sadd.s32 0, 0
    %p57 = scmp.lt.s32.totalorder %s56, 0
    %s58 = scalar_select %p57, %s56, 0
    %s59 = smul.u32 2, %s58
    %p60 = scmp.eq.s32.totalorder 0, 0
    // Predicated region
    $region18: #{tpu_custom_call.1} parent=1 // pred_check
      %p61 = pneg %p60
    $region19: #{tpu_custom_call.1} parent=1 // pred_check_branch
      %63 = sbr.rel (%p61) target = $region21
    $region20: #{tpu_custom_call.1} parent=1 // pred_region
      %64 = vst [vmem:[#allocation7] sm:$0xff] 0.0
    $region21: #{tpu_custom_call.1} parent=1 // pred_fallthru
      _
    %v65 = vld [vmem:[#allocation2] sm:$0xff]
    %v66 = vld [vmem:[#allocation2 + $0x8] sm:$0xff]
    %v67 = vld [vmem:[#allocation5] sm:$0xff]
    %v68 = vld [vmem:[#allocation5 + $0x8] sm:$0xff]
    %v69 = vmul.f32 %v67, 0.8
    %v70 = vmul.f32 %v68, 0.8
    %v71 = vadd.f32 %v69, 0.1
    %v72 = vadd.f32 %v70, 0.1
    %v73 = vmax.f32 %v65, 0.0
    %v74 = vmax.f32 %v66, 0.0
    %v75 = vmul.f32 %v65, %v71
    %v76 = vmul.f32 %v66, %v72
    %v77 = vsub.f32 %v73, %v75
    %v78 = vsub.f32 %v74, %v76
    %v79 = vand.u32 2147483647, %v65
    %v80 = vand.u32 2147483647, %v66
    %v81 = vsub.f32 0.0, %v79
    %v82 = vsub.f32 0.0, %v80
    %v83 = vmul.f32 %v81, 1.442695
    %v84 = vpow.pop %v83
    %v85 = vmul.f32 %v82, 1.442695
    %v86 = vpow.pop %v85
    %v87 = vadd.f32 %v84, 1.0
    %v88 = vlog2.pop %v87
    %v89 = vmul.f32 %v88, 0.6931472
    %v90 = vmul.f32 -0.5, %v84
    %v91 = vadd.f32 %v90, 1.0
    %v92 = vmul.f32 %v91, %v84
    %v93 = vand.u32 2147483647, %v84
    %vm94 = vcmp.lt.f32.partialorder %v93, 0.0004427343
    %v95 = vsel %vm94, %v92, %v89
    %v96 = vadd.f32 %v86, 1.0
    %v97 = vlog2.pop %v96
    %v98 = vmul.f32 %v97, 0.6931472
    %v99 = vmul.f32 -0.5, %v86
    %v100 = vadd.f32 %v99, 1.0
    %v101 = vmul.f32 %v100, %v86
    %v102 = vand.u32 2147483647, %v86
    %vm103 = vcmp.lt.f32.partialorder %v102, 0.0004427343
    %v104 = vsel %vm103, %v101, %v98
    %v105 = vadd.f32 %v77, %v95
    %v106 = vadd.f32 %v78, %v104
    %vm107 = vcmp.eq.f32.partialorder %v67, -100.0
    %vm108 = vcmp.eq.f32.partialorder %v68, -100.0
    %v109 = vsel %vm107, 0.0, %v105
    %v110 = vsel %vm108, 0.0, %v106
    %v111 = vadd.f32 %v109, %v110
    %v112 = vld [vmem:[#allocation7] sm:$0xff]
    %v113 = vadd.f32 %v112, %v111
    %114 = vst [vmem:[#allocation7] sm:$0xff] %v113
    // Predicated region
    $region22: #{tpu_custom_call.1} parent=1 // pred_check
      _
    $region23: #{tpu_custom_call.1} parent=1 // pred_check_branch
      %116 = sbr.rel (0) target = $region25
    $region24: #{tpu_custom_call.1} parent=1 // pred_region
      %s118 = ssub.s32 128, 128
      %119 = vsyncadd [#allocation4], %s118
      %s121 = sshll.u32 [#allocation7], 4
      %s122 = int_to_ptr.vmem [resolvable:$true] %s121
      %124 = dma.vmem_to_hbm [thread:$0]  %s122, 128, %s2, [#allocation4]
    $region25: #{tpu_custom_call.1} parent=1 // pred_fallthru
      _
    // Predicated region
    $region26: #{tpu_custom_call.1} parent=1 // pred_check
      _
    $region27: #{tpu_custom_call.1} parent=1 // pred_check_branch
      %126 = sbr.rel (0) target = $region29
    $region28: #{tpu_custom_call.1} parent=1 // pred_region
      %127 = dma.done [#allocation4], 128
    $region29: #{tpu_custom_call.1} parent=1 // pred_fallthru
      _
    %128 = vsyncpa [#allocation3], 1
    %129 = vsyncpa [#allocation6], 1
    %130 = vsyncpa [#allocation4], 1

</llo_original>
